<compile_context>
chip_gen: v6e
topology: v6e:2x2x1
jax: 0.10.0
libtpu: 0.0.40
codegen_flags: <defaults>
</compile_context>

<pallas_src>
import functools

import jax
import jax.numpy as jnp
from jax.experimental import pallas as pl
from jax.experimental.pallas import tpu as pltpu


def _round_up(v, k):
    return (v + k - 1) // k * k


def _logreg_kernel(x_ref, w_ref, b_ref, o_ref, *, n_feature):
    # x_ref: (tm, 2*n_feature) f32 -- row i is [x_even_i | x_odd_i] (contiguous pair).
    # TODO(synk): if n_feature is ever not a multiple of 128, pass even/odd rows as
    # two separate (m, n_feature) inputs instead; the slices below would then cross
    # (8,128) tile boundaries and Mosaic would materialize VMEM copies.
    x = x_ref[...]
    prop = x[:, n_feature:] * x[:, :n_feature]            # odd * even        (VPU)
    # Linear: prop @ W (weight pre-transposed to (n_feature, n_hidden) in the wrapper).
    val = jnp.dot(prop, w_ref[...], preferred_element_type=jnp.float32)      # MXU
    val = val + b_ref[...]                                 # (1, n_hidden) broadcast
    # sigmoid(v) = 0.5*(tanh(v/2)+1): single EUP op, f32-exact (no approx recip).
    o_ref[...] = (0.5 * (jnp.tanh(0.5 * val) + 1.0)).astype(o_ref.dtype)


def _input_tile_budget_bytes():
    """Per-input-tile byte budget; halved on 64 MiB-VMEM parts (v7x)."""
    try:
        vmem = pltpu.get_tpu_info().vmem_capacity_bytes
    except Exception:
        vmem = 64 << 20  # conservative fallback (assume v7x-sized VMEM)
    return (2 << 20) if vmem <= (64 << 20) else (4 << 20)


def _pick_row_tile(m, bytes_per_row):
    """Row tile: multiple of 8, <=2048 rows, ~2-4 MiB of input bytes per tile."""
    budget = _input_tile_budget_bytes()
    tm = min(2048, max(8, budget // max(bytes_per_row, 1)))
    tm = max(8, (tm // 8) * 8)
    if tm >= m and m > 8:
        # Keep >= 2 grid steps so dimension_semantics=("parallel",) can feed both
        # v7x TensorCores and BlockSpec pipelining has DMA to overlap with compute.
        tm = _round_up(pl.cdiv(m, 2), 8)
    return min(tm, _round_up(m, 8))


def logistic_regression_forward(x, weight, bias):
    """x: (node_num, n_feature) f32; weight: (n_hidden, n_feature); bias: (n_hidden,)."""
    node_num, n_feature = x.shape
    n_hidden = weight.shape[0]
    m = node_num // 2

    # Copy-free layout change: row i of x2 = [x[2i] | x[2i+1]] (contiguous row pair).
    x2 = x[: 2 * m].reshape(m, 2 * n_feature)
    # TODO(synk): feed x2 as bf16 when the upstream producer already emits bf16 --
    # this kernel is HBM-read bound, so halving the x2 stream is ~2x on v6e/v7x
    # (on v5e, upcast to f32 after load; the win there is purely DMA bytes).
    w_t = weight.T                      # (n_feature, n_hidden): plain prop @ w on MXU
    b2d = bias.reshape(1, n_hidden)

    itemsize = jnp.dtype(x2.dtype).itemsize
    tm = _pick_row_tile(m, 2 * n_feature * itemsize)
    grid = (pl.cdiv(m, tm),)            # partial last block masked by Pallas

    # Explicit VMEM budget: 2x input buffers + 2x lane-padded output buffers +
    # resident padded weight/bias + slack.
    in_tile = tm * 2 * n_feature * itemsize
    out_tile = tm * _round_up(n_hidden, 128) * 4
    w_bytes = _round_up(n_feature, 8) * _round_up(n_hidden, 128) * 4
    vmem_limit = int(max(2 * in_tile + 2 * out_tile + w_bytes + (2 << 20), 16 << 20))

    cost = pl.CostEstimate(
        flops=2 * m * n_feature * n_hidden + m * n_feature,
        transcendentals=m * n_hidden,
        bytes_accessed=(x2.size + w_t.size + b2d.size + m * n_hidden) * itemsize,
    )

    out = pl.pallas_call(
        functools.partial(_logreg_kernel, n_feature=n_feature),
        out_shape=jax.ShapeDtypeStruct((m, n_hidden), jnp.float32),
        grid=grid,
        in_specs=[
            pl.BlockSpec((tm, 2 * n_feature), lambda i: (i, 0)),      # streamed row tiles
            pl.BlockSpec((n_feature, n_hidden), lambda i: (0, 0)),    # resident weight
            pl.BlockSpec((1, n_hidden), lambda i: (0, 0)),            # resident bias
        ],
        out_specs=pl.BlockSpec((tm, n_hidden), lambda i: (i, 0)),
        compiler_params=pltpu.CompilerParams(
            dimension_semantics=("parallel",),
            vmem_limit_bytes=vmem_limit,
        ),
        cost_estimate=cost,
    )(x2, w_t, b2d)

    # Match PyTorch's .squeeze()
    return jnp.squeeze(out)


if __name__ == "__main__":
    node_num = 2048
    n_feature = 128
    n_hidden = 16

    key = jax.random.PRNGKey(0)
    kx, kw, kb = jax.random.split(key, 3)

    x = jax.random.normal(kx, (node_num, n_feature), dtype=jnp.float32)
    # Deterministic init mimicking torch.nn.Linear's uniform(-1/sqrt(fan_in), 1/sqrt(fan_in))
    bound = 1.0 / float(n_feature) ** 0.5
    weight = jax.random.uniform(kw, (n_hidden, n_feature), jnp.float32, -bound, bound)
    bias = jax.random.uniform(kb, (n_hidden,), jnp.float32, -bound, bound)

    out = logistic_regression_forward(x, weight, bias)
    out = jax.block_until_ready(out)

    # Plain-JAX reference of the PyTorch forward.
    prop = x[1::2] * x[0::2]
    ref = jnp.squeeze(jax.nn.sigmoid(prop @ weight.T + bias))
    assert out.shape == ref.shape
    # The tanh-form sigmoid is f32-exact (no approx reciprocal); the remaining
    # tolerance only covers possible MXU f32-pass differences between the Pallas
    # dot and the XLA reference dot (observed error is typically ~1e-6).
    max_err = float(jnp.max(jnp.abs(out - ref)))
    assert jnp.allclose(out, ref, atol=1e-3, rtol=1e-3), max_err

    print("KERNEL_OK")
</pallas_src>

<mosaic_0001>
module attributes {stable_mosaic.version = 11 : i64} {
  func.func @_logreg_kernel(%arg0: i32, %arg1: memref<512x256xf32, #tpu.memory_space<vmem>>, %arg2: memref<128x16xf32, #tpu.memory_space<vmem>>, %arg3: memref<1x16xf32, #tpu.memory_space<vmem>>, %arg4: memref<512x16xf32, #tpu.memory_space<vmem>>) attributes {dimension_semantics = [#tpu.dimension_semantics<parallel>], iteration_bounds = array<i64: 2>, scalar_prefetch = 0 : i64, scratch_operands = 0 : i64, tpu.core_type = #tpu.core_type<tc>, window_params = [{transform_indices = @transform_0, window_bounds = array<i64: 512, 256>}, {pipeline_mode = #tpu.pipeline_mode<synchronous>, transform_indices = @transform_1, window_bounds = array<i64: 128, 16>}, {pipeline_mode = #tpu.pipeline_mode<synchronous>, transform_indices = @transform_2, window_bounds = array<i64: 1, 16>}, {transform_indices = @transform_3, window_bounds = array<i64: 512, 16>}]} {
    %c0 = arith.constant 0 : index
    %c0_0 = arith.constant 0 : index
    %0 = vector.load %arg1[%c0, %c0_0] : memref<512x256xf32, #tpu.memory_space<vmem>>, vector<512x256xf32>
    %1 = vector.extract_strided_slice %0 {offsets = [0, 128], sizes = [512, 128], strides = [1, 1]} : vector<512x256xf32> to vector<512x128xf32>
    %2 = vector.extract_strided_slice %0 {offsets = [0, 0], sizes = [512, 128], strides = [1, 1]} : vector<512x256xf32> to vector<512x128xf32>
    %3 = arith.mulf %1, %2 : vector<512x128xf32>
    %c0_1 = arith.constant 0 : index
    %c0_2 = arith.constant 0 : index
    %4 = vector.load %arg2[%c0_1, %c0_2] : memref<128x16xf32, #tpu.memory_space<vmem>>, vector<128x16xf32>
    %cst = arith.constant dense<0.000000e+00> : vector<512x16xf32>
    %5 = tpu.matmul %3, %4, %cst {dimension_numbers = #tpu.dot_dimension_numbers<[1], [0], [0], [1], [0, 0, 1, 1], [], []>} : vector<512x128xf32>, vector<128x16xf32>, vector<512x16xf32> -> vector<512x16xf32>
    %c0_3 = arith.constant 0 : index
    %c0_4 = arith.constant 0 : index
    %6 = vector.load %arg3[%c0_3, %c0_4] : memref<1x16xf32, #tpu.memory_space<vmem>>, vector<1x16xf32>
    %7 = vector.broadcast %6 : vector<1x16xf32> to vector<512x16xf32>
    %8 = arith.addf %5, %7 : vector<512x16xf32>
    %cst_5 = arith.constant 5.000000e-01 : f32
    %9 = vector.broadcast %cst_5 : f32 to vector<512x16xf32>
    %10 = arith.mulf %9, %8 : vector<512x16xf32>
    %11 = math.tanh %10 : vector<512x16xf32>
    %cst_6 = arith.constant 1.000000e+00 : f32
    %12 = vector.broadcast %cst_6 : f32 to vector<512x16xf32>
    %13 = arith.addf %11, %12 : vector<512x16xf32>
    %cst_7 = arith.constant 5.000000e-01 : f32
    %14 = vector.broadcast %cst_7 : f32 to vector<512x16xf32>
    %15 = arith.mulf %14, %13 : vector<512x16xf32>
    %c0_8 = arith.constant 0 : index
    %c0_9 = arith.constant 0 : index
    %16 = vector.load %arg4[%c0_8, %c0_9] : memref<512x16xf32, #tpu.memory_space<vmem>>, vector<512x16xf32>
    tpu.vector_store %arg4[%c0_8, %c0_9], %15 {strides = array<i32>} : memref<512x16xf32, #tpu.memory_space<vmem>>, vector<512x16xf32>,
    return
  }
  func.func @transform_0(%arg0: i32) -> (i32, i32) {
    %c0_i32 = arith.constant 0 : i32
    %c0_i32_0 = arith.constant 0 : i32
    return %arg0, %c0_i32 : i32, i32
  }
  func.func @transform_1(%arg0: i32) -> (i32, i32) {
    %c0_i32 = arith.constant 0 : i32
    %c0_i32_0 = arith.constant 0 : i32
    %c0_i32_1 = arith.constant 0 : i32
    return %c0_i32, %c0_i32_0 : i32, i32
  }
  func.func @transform_2(%arg0: i32) -> (i32, i32) {
    %c0_i32 = arith.constant 0 : i32
    %c0_i32_0 = arith.constant 0 : i32
    %c0_i32_1 = arith.constant 0 : i32
    return %c0_i32, %c0_i32_0 : i32, i32
  }
  func.func @transform_3(%arg0: i32) -> (i32, i32) {
    %c0_i32 = arith.constant 0 : i32
    %c0_i32_0 = arith.constant 0 : i32
    return %arg0, %c0_i32 : i32, i32
  }
}

</mosaic_0001>

<llo_original>
// kernel: tpu_custom_call.1
$region0: #{tpu_custom_call.1}
  #allocation0 [shape = 'u32[]', space=smem, size = 0x4, offset = 0x4, fixed_abs, tag = 'smem constant byte address 0x4 - core index']
  #allocation1 [shape = 'u32[144,128]{1,0:T(1,128)}', space=vmem, size = 0x12000, scoped, tag = 'internal scratch']
  %s0 = inlined_call_operand.hbm [shape: f32[1024,256], index: 0, kind: input, shape index: {}]
  %s1 = inlined_call_operand.vmem [shape: f32[128,16], index: 1, kind: input, shape index: {}]
  %s2 = inlined_call_operand.vmem [shape: f32[1,16], index: 2, kind: input, shape index: {}]
  %s3 = inlined_call_operand.vmem [shape: f32[1024,16], index: 3, kind: output, shape index: {}]
  %s4 = sld [smem:[#allocation0]]
  $region49: #{tpu_custom_call.1} parent=0
    _
  %s6 = ssub.s32 1, %s4
  %s7 = scalar_select 0, %s6, %s4
  $region1: #{tpu_custom_call.1} parent=0
    #allocation2 [shape = 'u8[1048576]{0}', space=vmem, size = 0x100000, scoped, tag = 'input window, operand 0']
    #allocation3 [shape = 's32[2]{0}', space=sflag, size = 0x8, scoped, tag = 'scoped memory for tpu_custom_call.1']
    %8 = vsyncpa [#allocation3], 0
    %s9 = scalar_lea.sflag [#allocation3], 1
    %10 = vsyncpa %s9, 0
    loop: start=0, step=1, limit=4
    $region2: #{tpu_custom_call.1} parent=1 // loop_pre_header
      _
    $region3: #{tpu_custom_call.1} parent=1 // loop_header
      %s12 = sphi 0, %s16
      %p13 = scmp.ge.s32.totalorder %s12, 4
      %s22 = sphi 0, %s24
      %s25 = sphi 0, %s22
      %s26 = sphi 0, %s25
      %s42 = sphi 0, %s26
      %s46 = sphi 0, %s46
      %s48 = sphi 0, %s46
      %s49 = sphi 0, %s48
      %s63 = sphi 0, %s49
      %s67 = sphi 0, %s67
      %s69 = sphi 0, %s67
      %s70 = sphi 0, %s69
      %s84 = sphi 0, %s70
      %s90 = sphi 0, %s92
      %s93 = sphi 0, %s90
      %s94 = sphi 0, %s93
      %s110 = sphi 0, %s94
    $region4: #{tpu_custom_call.1} parent=1 // loop_header_branch
      %15 = sbr.rel (%p13) target = $region8
    $region5: #{tpu_custom_call.1} parent=1 // loop_body
      %s17 = ssub.s32 %s12, 1
      %s18 = ssub.s32 %s12, 2
      %s19 = sadd.s32 %s12, 1
      %s20 = ssub.s32 %s12, %s19
      %p21 = scmp.eq.s32.totalorder %s20, 0
      %s23 = sadd.s32 %s22, 1
      %s24 = scalar_select %p21, %s22, %s23
      %p27 = pneg %p21
      %p28 = scmp.eq.s32.totalorder %s12, 1
      %p29 = por %p27, %p28
      %p30 = scmp.ne.s32.totalorder %s22, %s25
      %p31 = scmp.eq.s32.totalorder %s12, 0
      %p32 = por %p30, %p31
      %p33 = scmp.ne.s32.totalorder %s22, %s25
      %p34 = scmp.eq.s32.totalorder %s17, 1
      %p35 = por %p33, %p34
      %p36 = scmp.ne.s32.totalorder %s25, %s26
      %p37 = scmp.eq.s32.totalorder %s17, 0
      %p38 = por %p36, %p37
      %p39 = scmp.ne.s32.totalorder %s25, %s26
      %p40 = scmp.eq.s32.totalorder %s18, 1
      %p41 = por %p39, %p40
      %p43 = scmp.ne.s32.totalorder %s26, %s42
      %p44 = scmp.eq.s32.totalorder %s18, 0
      %p45 = por %p43, %p44
      %s47 = sadd.s32 %s46, 1
      %p50 = scmp.eq.s32.totalorder %s12, 1
      %p51 = scmp.ne.s32.totalorder %s46, %s48
      %p52 = scmp.eq.s32.totalorder %s12, 0
      %p53 = por %p51, %p52
      %p54 = scmp.ne.s32.totalorder %s46, %s48
      %p55 = scmp.eq.s32.totalorder %s17, 1
      %p56 = por %p54, %p55
      %p57 = scmp.ne.s32.totalorder %s48, %s49
      %p58 = scmp.eq.s32.totalorder %s17, 0
      %p59 = por %p57, %p58
      %p60 = scmp.ne.s32.totalorder %s48, %s49
      %p61 = scmp.eq.s32.totalorder %s18, 1
      %p62 = por %p60, %p61
      %p64 = scmp.ne.s32.totalorder %s49, %s63
      %p65 = scmp.eq.s32.totalorder %s18, 0
      %p66 = por %p64, %p65
      %s68 = sadd.s32 %s67, 1
      %p71 = scmp.eq.s32.totalorder %s12, 1
      %p72 = scmp.ne.s32.totalorder %s67, %s69
      %p73 = scmp.eq.s32.totalorder %s12, 0
      %p74 = por %p72, %p73
      %p75 = scmp.ne.s32.totalorder %s67, %s69
      %p76 = scmp.eq.s32.totalorder %s17, 1
      %p77 = por %p75, %p76
      %p78 = scmp.ne.s32.totalorder %s69, %s70
      %p79 = scmp.eq.s32.totalorder %s17, 0
      %p80 = por %p78, %p79
      %p81 = scmp.ne.s32.totalorder %s69, %s70
      %p82 = scmp.eq.s32.totalorder %s18, 1
      %p83 = por %p81, %p82
      %p85 = scmp.ne.s32.totalorder %s70, %s84
      %p86 = scmp.eq.s32.totalorder %s18, 0
      %p87 = por %p85, %p86
      %s88 = ssub.s32 %s12, %s19
      %p89 = scmp.eq.s32.totalorder %s88, 0
      %s91 = sadd.s32 %s90, 1
      %s92 = scalar_select %p89, %s90, %s91
      %p95 = pneg %p89
      %p96 = scmp.eq.s32.totalorder %s12, 1
      %p97 = por %p95, %p96
      %p98 = scmp.ne.s32.totalorder %s90, %s93
      %p99 = scmp.eq.s32.totalorder %s12, 0
      %p100 = por %p98, %p99
      %p101 = scmp.ne.s32.totalorder %s90, %s93
      %p102 = scmp.eq.s32.totalorder %s17, 1
      %p103 = por %p101, %p102
      %p104 = scmp.ne.s32.totalorder %s93, %s94
      %p105 = scmp.eq.s32.totalorder %s17, 0
      %p106 = por %p104, %p105
      %p107 = scmp.ne.s32.totalorder %s93, %s94
      %p108 = scmp.eq.s32.totalorder %s18, 1
      %p109 = por %p107, %p108
      %p111 = scmp.ne.s32.totalorder %s94, %s110
      %p112 = scmp.eq.s32.totalorder %s18, 0
      %p113 = por %p111, %p112
      %p114 = scmp.le.s32.totalorder 1, %s12
      %p115 = scmp.lt.s32.totalorder %s12, 3
      %p116 = pnand %p114, %p115
      %p117 = pneg %p116
      // Predicated region
      $region9: #{tpu_custom_call.1} parent=5 // pred_check
        _
      $region10: #{tpu_custom_call.1} parent=5 // pred_check_branch
        %119 = sbr.rel (%p116) target = $region12
      $region11: #{tpu_custom_call.1} parent=5 // pred_region
        %s120 = ssub.s32 %s12, 1
        // Predicated region
        $region13: #{tpu_custom_call.1} parent=11 // pred_check
          %p121 = pneg %p59
        $region14: #{tpu_custom_call.1} parent=11 // pred_check_branch
          %123 = sbr.rel (%p121) target = $region16
        $region15: #{tpu_custom_call.1} parent=11 // pred_region
          _
        $region16: #{tpu_custom_call.1} parent=11 // pred_fallthru
          _
        // Predicated region
        $region17: #{tpu_custom_call.1} parent=11 // pred_check
          %p124 = pneg %p80
        $region18: #{tpu_custom_call.1} parent=11 // pred_check_branch
          %126 = sbr.rel (%p124) target = $region20
        $region19: #{tpu_custom_call.1} parent=11 // pred_region
          _
        $region20: #{tpu_custom_call.1} parent=11 // pred_fallthru
          _
      $region12: #{tpu_custom_call.1} parent=5 // pred_fallthru
        _
      %p127 = scmp.lt.s32.totalorder %s12, 2
      // Predicated region
      $region21: #{tpu_custom_call.1} parent=5 // pred_check
        %p128 = pneg %p127
      $region22: #{tpu_custom_call.1} parent=5 // pred_check_branch
        %130 = sbr.rel (%p128) target = $region24
      $region23: #{tpu_custom_call.1} parent=5 // pred_region
        // Predicated region
        $region25: #{tpu_custom_call.1} parent=23 // pred_check
          %p131 = pneg %p32
        $region26: #{tpu_custom_call.1} parent=23 // pred_check_branch
          %133 = sbr.rel (%p131) target = $region28
        $region27: #{tpu_custom_call.1} parent=23 // pred_region
          %s134 = sand.u32 %s22, 1
          %s135 = scalar_lea.sflag [#allocation3], %s134
          %s136 = sand.u32 %s22, 1
          %s137 = smul.addr %s136, 1024
          %s138 = scalar_lea.vmem [#allocation2], %s137
          %s139 = smul.u32 64, %s12
          %s141 = ssub.s32 16384, 16384
          %142 = vsyncadd %s135, %s141
          %s143 = smul.addr %s139, 2
          %s144 = smul.addr %s143, 128
          %s145 = scalar_lea.hbm %s0, %s144
          %s146 = sshll.u32 %s138, 4
          %s147 = int_to_ptr.vmem [resolvable:$true] %s146
          %152 = dma.hbm_to_vmem [thread:$0]  %s145, 16384, %s147, %s135, 256, 256, 16
        $region28: #{tpu_custom_call.1} parent=23 // pred_fallthru
          _
      $region24: #{tpu_custom_call.1} parent=5 // pred_fallthru
        _
      %p153 = scmp.le.s32.totalorder 1, %s12
      %p154 = scmp.lt.s32.totalorder %s12, 3
      %p155 = pnand %p153, %p154
      %p156 = pneg %p155
      // Predicated region
      $region29: #{tpu_custom_call.1} parent=5 // pred_check
        _
      $region30: #{tpu_custom_call.1} parent=5 // pred_check_branch
        %158 = sbr.rel (%p155) target = $region32
      $region31: #{tpu_custom_call.1} parent=5 // pred_region
        %s159 = ssub.s32 %s12, 1
        %s160 = sand.u32 %s25, 1
        %s161 = scalar_lea.sflag [#allocation3], %s160
        %s162 = sand.u32 %s25, 1
        %s163 = smul.addr %s162, 1024
        %s164 = scalar_lea.vmem [#allocation2], %s163
        // Predicated region
        $region33: #{tpu_custom_call.1} parent=31 // pred_check
          %p165 = pneg %p38
        $region34: #{tpu_custom_call.1} parent=31 // pred_check_branch
          %167 = sbr.rel (%p165) target = $region36
        $region35: #{tpu_custom_call.1} parent=31 // pred_region
          %168 = dma.done %s161, 16384
        $region36: #{tpu_custom_call.1} parent=31 // pred_fallthru
          _
        %s169 = sand.u32 %s25, 1
        %s170 = scalar_lea.sflag [#allocation3], %s169
        %s171 = sand.u32 %s25, 1
        %s172 = smul.addr %s171, 1024
        %s173 = scalar_lea.vmem [#allocation2], %s172
        %p174 = pneg %p38
        %p175 = pneg %p35
        %p176 = pneg %p59
        %p177 = pneg %p56
        %p178 = pneg %p80
        %p179 = pneg %p77
        %p180 = pneg %p106
        %p181 = pneg %p103
        %s182 = smul.u32 64, %s17
        %p183 = scmp.lt.s32.totalorder %s182, 127
        %s184 = scalar_select %p183, %s182, 127
        %s185 = smul.addr %s184, 8
        %s186 = scalar_lea.vmem %s3, %s185
        %s187 = smul.u32 64, %s17
        %s188 = smul.u32 64, %s17
        %p189 = scmp.lt.s32.totalorder %s188, 127
        %s190 = scalar_select %p189, %s188, 127
        %s191 = smul.addr %s190, 8
        %s192 = scalar_lea.vmem %s3, %s191
        %s193 = smul.u32 64, %s17
        %v194 = vld [vmem:[%s164] sm:$0xff]
        %v195 = vld [vmem:[%s164 + $0x8] sm:$0xff]
        %v196 = vld [vmem:[%s164 + $0x10] sm:$0xff]
        %v197 = vld [vmem:[%s164 + $0x18] sm:$0xff]
        %v198 = vld [vmem:[%s164 + $0x20] sm:$0xff]
        %v199 = vld [vmem:[%s164 + $0x28] sm:$0xff]
        %v200 = vld [vmem:[%s164 + $0x30] sm:$0xff]
        %v201 = vld [vmem:[%s164 + $0x38] sm:$0xff]
        %v202 = vld [vmem:[%s164 + $0x40] sm:$0xff]
        %v203 = vld [vmem:[%s164 + $0x48] sm:$0xff]
        %v204 = vld [vmem:[%s164 + $0x50] sm:$0xff]
        %v205 = vld [vmem:[%s164 + $0x58] sm:$0xff]
        %v206 = vld [vmem:[%s164 + $0x60] sm:$0xff]
        %v207 = vld [vmem:[%s164 + $0x68] sm:$0xff]
        %v208 = vld [vmem:[%s164 + $0x70] sm:$0xff]
        %v209 = vld [vmem:[%s164 + $0x78] sm:$0xff]
        %v210 = vld [vmem:[%s164 + $0x80] sm:$0xff]
        %v211 = vld [vmem:[%s164 + $0x88] sm:$0xff]
        %v212 = vld [vmem:[%s164 + $0x90] sm:$0xff]
        %v213 = vld [vmem:[%s164 + $0x98] sm:$0xff]
        %v214 = vld [vmem:[%s164 + $0xa0] sm:$0xff]
        %v215 = vld [vmem:[%s164 + $0xa8] sm:$0xff]
        %v216 = vld [vmem:[%s164 + $0xb0] sm:$0xff]
        %v217 = vld [vmem:[%s164 + $0xb8] sm:$0xff]
        %v218 = vld [vmem:[%s164 + $0xc0] sm:$0xff]
        %v219 = vld [vmem:[%s164 + $0xc8] sm:$0xff]
        %v220 = vld [vmem:[%s164 + $0xd0] sm:$0xff]
        %v221 = vld [vmem:[%s164 + $0xd8] sm:$0xff]
        %v222 = vld [vmem:[%s164 + $0xe0] sm:$0xff]
        %v223 = vld [vmem:[%s164 + $0xe8] sm:$0xff]
        %v224 = vld [vmem:[%s164 + $0xf0] sm:$0xff]
        %v225 = vld [vmem:[%s164 + $0xf8] sm:$0xff]
        %v226 = vld [vmem:[%s164 + $0x100] sm:$0xff]
        %v227 = vld [vmem:[%s164 + $0x108] sm:$0xff]
        %v228 = vld [vmem:[%s164 + $0x110] sm:$0xff]
        %v229 = vld [vmem:[%s164 + $0x118] sm:$0xff]
        %v230 = vld [vmem:[%s164 + $0x120] sm:$0xff]
        %v231 = vld [vmem:[%s164 + $0x128] sm:$0xff]
        %v232 = vld [vmem:[%s164 + $0x130] sm:$0xff]
        %v233 = vld [vmem:[%s164 + $0x138] sm:$0xff]
        %v234 = vld [vmem:[%s164 + $0x140] sm:$0xff]
        %v235 = vld [vmem:[%s164 + $0x148] sm:$0xff]
        %v236 = vld [vmem:[%s164 + $0x150] sm:$0xff]
        %v237 = vld [vmem:[%s164 + $0x158] sm:$0xff]
        %v238 = vld [vmem:[%s164 + $0x160] sm:$0xff]
        %v239 = vld [vmem:[%s164 + $0x168] sm:$0xff]
        %v240 = vld [vmem:[%s164 + $0x170] sm:$0xff]
        %v241 = vld [vmem:[%s164 + $0x178] sm:$0xff]
        %v242 = vld [vmem:[%s164 + $0x180] sm:$0xff]
        %v243 = vld [vmem:[%s164 + $0x188] sm:$0xff]
        %v244 = vld [vmem:[%s164 + $0x190] sm:$0xff]
        %v245 = vld [vmem:[%s164 + $0x198] sm:$0xff]
        %v246 = vld [vmem:[%s164 + $0x1a0] sm:$0xff]
        %v247 = vld [vmem:[%s164 + $0x1a8] sm:$0xff]
        %v248 = vld [vmem:[%s164 + $0x1b0] sm:$0xff]
        %v249 = vld [vmem:[%s164 + $0x1b8] sm:$0xff]
        %v250 = vld [vmem:[%s164 + $0x1c0] sm:$0xff]
        %v251 = vld [vmem:[%s164 + $0x1c8] sm:$0xff]
        %v252 = vld [vmem:[%s164 + $0x1d0] sm:$0xff]
        %v253 = vld [vmem:[%s164 + $0x1d8] sm:$0xff]
        %v254 = vld [vmem:[%s164 + $0x1e0] sm:$0xff]
        %v255 = vld [vmem:[%s164 + $0x1e8] sm:$0xff]
        %v256 = vld [vmem:[%s164 + $0x1f0] sm:$0xff]
        %v257 = vld [vmem:[%s164 + $0x1f8] sm:$0xff]
        %v258 = vld [vmem:[%s164 + $0x200] sm:$0xff]
        %v259 = vld [vmem:[%s164 + $0x208] sm:$0xff]
        %v260 = vld [vmem:[%s164 + $0x210] sm:$0xff]
        %v261 = vld [vmem:[%s164 + $0x218] sm:$0xff]
        %v262 = vld [vmem:[%s164 + $0x220] sm:$0xff]
        %v263 = vld [vmem:[%s164 + $0x228] sm:$0xff]
        %v264 = vld [vmem:[%s164 + $0x230] sm:$0xff]
        %v265 = vld [vmem:[%s164 + $0x238] sm:$0xff]
        %v266 = vld [vmem:[%s164 + $0x240] sm:$0xff]
        %v267 = vld [vmem:[%s164 + $0x248] sm:$0xff]
        %v268 = vld [vmem:[%s164 + $0x250] sm:$0xff]
        %v269 = vld [vmem:[%s164 + $0x258] sm:$0xff]
        %v270 = vld [vmem:[%s164 + $0x260] sm:$0xff]
        %v271 = vld [vmem:[%s164 + $0x268] sm:$0xff]
        %v272 = vld [vmem:[%s164 + $0x270] sm:$0xff]
        %v273 = vld [vmem:[%s164 + $0x278] sm:$0xff]
        %v274 = vld [vmem:[%s164 + $0x280] sm:$0xff]
        %v275 = vld [vmem:[%s164 + $0x288] sm:$0xff]
        %v276 = vld [vmem:[%s164 + $0x290] sm:$0xff]
        %v277 = vld [vmem:[%s164 + $0x298] sm:$0xff]
        %v278 = vld [vmem:[%s164 + $0x2a0] sm:$0xff]
        %v279 = vld [vmem:[%s164 + $0x2a8] sm:$0xff]
        %v280 = vld [vmem:[%s164 + $0x2b0] sm:$0xff]
        %v281 = vld [vmem:[%s164 + $0x2b8] sm:$0xff]
        %v282 = vld [vmem:[%s164 + $0x2c0] sm:$0xff]
        %v283 = vld [vmem:[%s164 + $0x2c8] sm:$0xff]
        %v284 = vld [vmem:[%s164 + $0x2d0] sm:$0xff]
        %v285 = vld [vmem:[%s164 + $0x2d8] sm:$0xff]
        %v286 = vld [vmem:[%s164 + $0x2e0] sm:$0xff]
        %v287 = vld [vmem:[%s164 + $0x2e8] sm:$0xff]
        %v288 = vld [vmem:[%s164 + $0x2f0] sm:$0xff]
        %v289 = vld [vmem:[%s164 + $0x2f8] sm:$0xff]
        %v290 = vld [vmem:[%s164 + $0x300] sm:$0xff]
        %v291 = vld [vmem:[%s164 + $0x308] sm:$0xff]
        %v292 = vld [vmem:[%s164 + $0x310] sm:$0xff]
        %v293 = vld [vmem:[%s164 + $0x318] sm:$0xff]
        %v294 = vld [vmem:[%s164 + $0x320] sm:$0xff]
        %v295 = vld [vmem:[%s164 + $0x328] sm:$0xff]
        %v296 = vld [vmem:[%s164 + $0x330] sm:$0xff]
        %v297 = vld [vmem:[%s164 + $0x338] sm:$0xff]
        %v298 = vld [vmem:[%s164 + $0x340] sm:$0xff]
        %v299 = vld [vmem:[%s164 + $0x348] sm:$0xff]
        %v300 = vld [vmem:[%s164 + $0x350] sm:$0xff]
        %v301 = vld [vmem:[%s164 + $0x358] sm:$0xff]
        %v302 = vld [vmem:[%s164 + $0x360] sm:$0xff]
        %v303 = vld [vmem:[%s164 + $0x368] sm:$0xff]
        %v304 = vld [vmem:[%s164 + $0x370] sm:$0xff]
        %v305 = vld [vmem:[%s164 + $0x378] sm:$0xff]
        %v306 = vld [vmem:[%s164 + $0x380] sm:$0xff]
        %v307 = vld [vmem:[%s164 + $0x388] sm:$0xff]
        %v308 = vld [vmem:[%s164 + $0x390] sm:$0xff]
        %v309 = vld [vmem:[%s164 + $0x398] sm:$0xff]
        %v310 = vld [vmem:[%s164 + $0x3a0] sm:$0xff]
        %v311 = vld [vmem:[%s164 + $0x3a8] sm:$0xff]
        %v312 = vld [vmem:[%s164 + $0x3b0] sm:$0xff]
        %v313 = vld [vmem:[%s164 + $0x3b8] sm:$0xff]
        %v314 = vld [vmem:[%s164 + $0x3c0] sm:$0xff]
        %v315 = vld [vmem:[%s164 + $0x3c8] sm:$0xff]
        %v316 = vld [vmem:[%s164 + $0x3d0] sm:$0xff]
        %v317 = vld [vmem:[%s164 + $0x3d8] sm:$0xff]
        %v318 = vld [vmem:[%s164 + $0x3e0] sm:$0xff]
        %v319 = vld [vmem:[%s164 + $0x3e8] sm:$0xff]
        %v320 = vld [vmem:[%s164 + $0x3f0] sm:$0xff]
        %v321 = vld [vmem:[%s164 + $0x3f8] sm:$0xff]
        %v322 = vmul.f32 %v195, %v194
        %v323 = vmul.f32 %v197, %v196
        %v324 = vmul.f32 %v199, %v198
        %v325 = vmul.f32 %v201, %v200
        %v326 = vmul.f32 %v203, %v202
        %v327 = vmul.f32 %v205, %v204
        %v328 = vmul.f32 %v207, %v206
        %v329 = vmul.f32 %v209, %v208
        %v330 = vmul.f32 %v211, %v210
        %v331 = vmul.f32 %v213, %v212
        %v332 = vmul.f32 %v215, %v214
        %v333 = vmul.f32 %v217, %v216
        %v334 = vmul.f32 %v219, %v218
        %v335 = vmul.f32 %v221, %v220
        %v336 = vmul.f32 %v223, %v222
        %v337 = vmul.f32 %v225, %v224
        %v338 = vmul.f32 %v227, %v226
        %v339 = vmul.f32 %v229, %v228
        %v340 = vmul.f32 %v231, %v230
        %v341 = vmul.f32 %v233, %v232
        %v342 = vmul.f32 %v235, %v234
        %v343 = vmul.f32 %v237, %v236
        %v344 = vmul.f32 %v239, %v238
        %v345 = vmul.f32 %v241, %v240
        %v346 = vmul.f32 %v243, %v242
        %v347 = vmul.f32 %v245, %v244
        %v348 = vmul.f32 %v247, %v246
        %v349 = vmul.f32 %v249, %v248
        %v350 = vmul.f32 %v251, %v250
        %v351 = vmul.f32 %v253, %v252
        %v352 = vmul.f32 %v255, %v254
        %v353 = vmul.f32 %v257, %v256
        %v354 = vmul.f32 %v259, %v258
        %v355 = vmul.f32 %v261, %v260
        %v356 = vmul.f32 %v263, %v262
        %v357 = vmul.f32 %v265, %v264
        %v358 = vmul.f32 %v267, %v266
        %v359 = vmul.f32 %v269, %v268
        %v360 = vmul.f32 %v271, %v270
        %v361 = vmul.f32 %v273, %v272
        %v362 = vmul.f32 %v275, %v274
        %v363 = vmul.f32 %v277, %v276
        %v364 = vmul.f32 %v279, %v278
        %v365 = vmul.f32 %v281, %v280
        %v366 = vmul.f32 %v283, %v282
        %v367 = vmul.f32 %v285, %v284
        %v368 = vmul.f32 %v287, %v286
        %v369 = vmul.f32 %v289, %v288
        %v370 = vmul.f32 %v291, %v290
        %v371 = vmul.f32 %v293, %v292
        %v372 = vmul.f32 %v295, %v294
        %v373 = vmul.f32 %v297, %v296
        %v374 = vmul.f32 %v299, %v298
        %v375 = vmul.f32 %v301, %v300
        %v376 = vmul.f32 %v303, %v302
        %v377 = vmul.f32 %v305, %v304
        %v378 = vmul.f32 %v307, %v306
        %v379 = vmul.f32 %v309, %v308
        %v380 = vmul.f32 %v311, %v310
        %v381 = vmul.f32 %v313, %v312
        %v382 = vmul.f32 %v315, %v314
        %v383 = vmul.f32 %v317, %v316
        %v384 = vmul.f32 %v319, %v318
        %v385 = vmul.f32 %v321, %v320
        %v386 = vld [vmem:[%s1] sm:$0xff]
        %v387 = vld [vmem:[%s1 + $0x8] sm:$0xff]
        %v388 = vld [vmem:[%s1 + $0x10] sm:$0xff]
        %v389 = vld [vmem:[%s1 + $0x18] sm:$0xff]
        %v390 = vld [vmem:[%s1 + $0x20] sm:$0xff]
        %v391 = vld [vmem:[%s1 + $0x28] sm:$0xff]
        %v392 = vld [vmem:[%s1 + $0x30] sm:$0xff]
        %v393 = vld [vmem:[%s1 + $0x38] sm:$0xff]
        %v394 = vld [vmem:[%s1 + $0x40] sm:$0xff]
        %v395 = vld [vmem:[%s1 + $0x48] sm:$0xff]
        %v396 = vld [vmem:[%s1 + $0x50] sm:$0xff]
        %v397 = vld [vmem:[%s1 + $0x58] sm:$0xff]
        %v398 = vld [vmem:[%s1 + $0x60] sm:$0xff]
        %v399 = vld [vmem:[%s1 + $0x68] sm:$0xff]
        %v400 = vld [vmem:[%s1 + $0x70] sm:$0xff]
        %v401 = vld [vmem:[%s1 + $0x78] sm:$0xff]
        %v402 = vld [vmem:[%s2] sm:$0x1]
        %v404 = vlaneseq
        %v405 = vshrl.u32 %v404, 7
        %v406 = vsub.s32 0, %v405
        %v407 = vrot.slane %v402, %v406
        %409 = vmatprep.subr.mxu0 0.0
        %410 = vmatpush1.msra.mxu0 %v401
        %411 = vmatprep.subr.mxu0 0.0
        %412 = vmatpush1.msra.mxu0 %v400
        %413 = vmatprep.subr.mxu0 0.0
        %414 = vmatpush1.msra.mxu0 %v399
        %415 = vmatprep.subr.mxu0 0.0
        %416 = vmatpush1.msra.mxu0 %v398
        %417 = vmatprep.subr.mxu0 0.0
        %418 = vmatpush1.msra.mxu0 %v397
        %419 = vmatprep.subr.mxu0 0.0
        %420 = vmatpush1.msra.mxu0 %v396
        %421 = vmatprep.subr.mxu0 0.0
        %422 = vmatpush1.msra.mxu0 %v395
        %423 = vmatprep.subr.mxu0 0.0
        %424 = vmatpush1.msra.mxu0 %v394
        %425 = vmatprep.subr.mxu0 0.0
        %426 = vmatpush1.msra.mxu0 %v393
        %427 = vmatprep.subr.mxu0 0.0
        %428 = vmatpush1.msra.mxu0 %v392
        %429 = vmatprep.subr.mxu0 0.0
        %430 = vmatpush1.msra.mxu0 %v391
        %431 = vmatprep.subr.mxu0 0.0
        %432 = vmatpush1.msra.mxu0 %v390
        %433 = vmatprep.subr.mxu0 0.0
        %434 = vmatpush1.msra.mxu0 %v389
        %435 = vmatprep.subr.mxu0 0.0
        %436 = vmatpush1.msra.mxu0 %v388
        %437 = vmatprep.subr.mxu0 0.0
        %438 = vmatpush1.msra.mxu0 %v387
        %439 = vmatprep.subr.mxu0 0.0
        %440 = vmatpush1.msra.mxu0 %v386
        %441 = vmatprep.subr.mxu0 0.0
        %442 = vmatpush2.msra.mxu0 0.0
        %443 = vmatprep.subr.mxu0 0.0
        %444 = vmatpush2.msra.mxu0 0.0
        %445 = vmatprep.subr.mxu0 0.0
        %446 = vmatpush2.msra.mxu0 0.0
        %447 = vmatprep.subr.mxu0 0.0
        %448 = vmatpush2.msra.mxu0 0.0
        %449 = vmatprep.subr.mxu0 0.0
        %450 = vmatpush2.msra.mxu0 0.0
        %451 = vmatprep.subr.mxu0 0.0
        %452 = vmatpush2.msra.mxu0 0.0
        %453 = vmatprep.subr.mxu0 0.0
        %454 = vmatpush2.msra.mxu0 0.0
        %455 = vmatprep.subr.mxu0 0.0
        %456 = vmatpush2.msra.mxu0 0.0
        %457 = vmatprep.subr.mxu0 0.0
        %458 = vmatpush2.msra.mxu0 0.0
        %459 = vmatprep.subr.mxu0 0.0
        %460 = vmatpush2.msra.mxu0 0.0
        %461 = vmatprep.subr.mxu0 0.0
        %462 = vmatpush2.msra.mxu0 0.0
        %463 = vmatprep.subr.mxu0 0.0
        %464 = vmatpush2.msra.mxu0 0.0
        %465 = vmatprep.subr.mxu0 0.0
        %466 = vmatpush2.msra.mxu0 0.0
        %467 = vmatprep.subr.mxu0 0.0
        %468 = vmatpush2.msra.mxu0 0.0
        %469 = vmatprep.subr.mxu0 0.0
        %470 = vmatpush2.msra.mxu0 0.0
        %471 = vmatprep.subr.mxu0 0.0
        %472 = vmatpush2.msra.mxu0 0.0
        %473 = vmatprep.mubr.f32.mxu0 0.0
        %474 = vmatmul.mubr.f32.gmra.mxu0 %v322
        %v475 = vpop.f32.mrf.mxu0
        %v476 = vadd.f32 %v407, %v475
        %v477 = vpop.f32.mrf.mxu0
        %478 = vmatprep.mubr.f32.mxu0 0.0
        %479 = vmatmul.mubr.f32.gmra.mxu0 %v323
        %v480 = vpop.f32.mrf.mxu0
        %v481 = vadd.f32 %v407, %v480
        %v482 = vpop.f32.mrf.mxu0
        %483 = vmatprep.mubr.f32.mxu0 0.0
        %484 = vmatmul.mubr.f32.gmra.mxu0 %v324
        %v485 = vpop.f32.mrf.mxu0
        %v486 = vadd.f32 %v407, %v485
        %v487 = vpop.f32.mrf.mxu0
        %488 = vmatprep.mubr.f32.mxu0 0.0
        %489 = vmatmul.mubr.f32.gmra.mxu0 %v325
        %v490 = vpop.f32.mrf.mxu0
        %v491 = vadd.f32 %v407, %v490
        %v492 = vpop.f32.mrf.mxu0
        %493 = vmatprep.mubr.f32.mxu0 0.0
        %494 = vmatmul.mubr.f32.gmra.mxu0 %v326
        %v495 = vpop.f32.mrf.mxu0
        %v496 = vadd.f32 %v407, %v495
        %v497 = vpop.f32.mrf.mxu0
        %498 = vmatprep.mubr.f32.mxu0 0.0
        %499 = vmatmul.mubr.f32.gmra.mxu0 %v327
        %v500 = vpop.f32.mrf.mxu0
        %v501 = vadd.f32 %v407, %v500
        %v502 = vpop.f32.mrf.mxu0
        %503 = vmatprep.mubr.f32.mxu0 0.0
        %504 = vmatmul.mubr.f32.gmra.mxu0 %v328
        %v505 = vpop.f32.mrf.mxu0
        %v506 = vadd.f32 %v407, %v505
        %v507 = vpop.f32.mrf.mxu0
        %508 = vmatprep.mubr.f32.mxu0 0.0
        %509 = vmatmul.mubr.f32.gmra.mxu0 %v329
        %v510 = vpop.f32.mrf.mxu0
        %v511 = vadd.f32 %v407, %v510
        %v512 = vpop.f32.mrf.mxu0
        %513 = vmatprep.mubr.f32.mxu0 0.0
        %514 = vmatmul.mubr.f32.gmra.mxu0 %v330
        %v515 = vpop.f32.mrf.mxu0
        %v516 = vadd.f32 %v407, %v515
        %v517 = vpop.f32.mrf.mxu0
        %518 = vmatprep.mubr.f32.mxu0 0.0
        %519 = vmatmul.mubr.f32.gmra.mxu0 %v331
        %v520 = vpop.f32.mrf.mxu0
        %v521 = vadd.f32 %v407, %v520
        %v522 = vpop.f32.mrf.mxu0
        %523 = vmatprep.mubr.f32.mxu0 0.0
        %524 = vmatmul.mubr.f32.gmra.mxu0 %v332
        %v525 = vpop.f32.mrf.mxu0
        %v526 = vadd.f32 %v407, %v525
        %v527 = vpop.f32.mrf.mxu0
        %528 = vmatprep.mubr.f32.mxu0 0.0
        %529 = vmatmul.mubr.f32.gmra.mxu0 %v333
        %v530 = vpop.f32.mrf.mxu0
        %v531 = vadd.f32 %v407, %v530
        %v532 = vpop.f32.mrf.mxu0
        %533 = vmatprep.mubr.f32.mxu0 0.0
        %534 = vmatmul.mubr.f32.gmra.mxu0 %v334
        %v535 = vpop.f32.mrf.mxu0
        %v536 = vadd.f32 %v407, %v535
        %v537 = vpop.f32.mrf.mxu0
        %538 = vmatprep.mubr.f32.mxu0 0.0
        %539 = vmatmul.mubr.f32.gmra.mxu0 %v335
        %v540 = vpop.f32.mrf.mxu0
        %v541 = vadd.f32 %v407, %v540
        %v542 = vpop.f32.mrf.mxu0
        %543 = vmatprep.mubr.f32.mxu0 0.0
        %544 = vmatmul.mubr.f32.gmra.mxu0 %v336
        %v545 = vpop.f32.mrf.mxu0
        %v546 = vadd.f32 %v407, %v545
        %v547 = vpop.f32.mrf.mxu0
        %548 = vmatprep.mubr.f32.mxu0 0.0
        %549 = vmatmul.mubr.f32.gmra.mxu0 %v337
        %v550 = vpop.f32.mrf.mxu0
        %v551 = vadd.f32 %v407, %v550
        %v552 = vpop.f32.mrf.mxu0
        %553 = vmatprep.mubr.f32.mxu0 0.0
        %554 = vmatmul.mubr.f32.gmra.mxu0 %v338
        %v555 = vpop.f32.mrf.mxu0
        %v556 = vadd.f32 %v407, %v555
        %v557 = vpop.f32.mrf.mxu0
        %558 = vmatprep.mubr.f32.mxu0 0.0
        %559 = vmatmul.mubr.f32.gmra.mxu0 %v339
        %v560 = vpop.f32.mrf.mxu0
        %v561 = vadd.f32 %v407, %v560
        %v562 = vpop.f32.mrf.mxu0
        %563 = vmatprep.mubr.f32.mxu0 0.0
        %564 = vmatmul.mubr.f32.gmra.mxu0 %v340
        %v565 = vpop.f32.mrf.mxu0
        %v566 = vadd.f32 %v407, %v565
        %v567 = vpop.f32.mrf.mxu0
        %568 = vmatprep.mubr.f32.mxu0 0.0
        %569 = vmatmul.mubr.f32.gmra.mxu0 %v341
        %v570 = vpop.f32.mrf.mxu0
        %v571 = vadd.f32 %v407, %v570
        %v572 = vpop.f32.mrf.mxu0
        %573 = vmatprep.mubr.f32.mxu0 0.0
        %574 = vmatmul.mubr.f32.gmra.mxu0 %v342
        %v575 = vpop.f32.mrf.mxu0
        %v576 = vadd.f32 %v407, %v575
        %v577 = vpop.f32.mrf.mxu0
        %578 = vmatprep.mubr.f32.mxu0 0.0
        %579 = vmatmul.mubr.f32.gmra.mxu0 %v343
        %v580 = vpop.f32.mrf.mxu0
        %v581 = vadd.f32 %v407, %v580
        %v582 = vpop.f32.mrf.mxu0
        %583 = vmatprep.mubr.f32.mxu0 0.0
        %584 = vmatmul.mubr.f32.gmra.mxu0 %v344
        %v585 = vpop.f32.mrf.mxu0
        %v586 = vadd.f32 %v407, %v585
        %v587 = vpop.f32.mrf.mxu0
        %588 = vmatprep.mubr.f32.mxu0 0.0
        %589 = vmatmul.mubr.f32.gmra.mxu0 %v345
        %v590 = vpop.f32.mrf.mxu0
        %v591 = vadd.f32 %v407, %v590
        %v592 = vpop.f32.mrf.mxu0
        %593 = vmatprep.mubr.f32.mxu0 0.0
        %594 = vmatmul.mubr.f32.gmra.mxu0 %v346
        %v595 = vpop.f32.mrf.mxu0
        %v596 = vadd.f32 %v407, %v595
        %v597 = vpop.f32.mrf.mxu0
        %598 = vmatprep.mubr.f32.mxu0 0.0
        %599 = vmatmul.mubr.f32.gmra.mxu0 %v347
        %v600 = vpop.f32.mrf.mxu0
        %v601 = vadd.f32 %v407, %v600
        %v602 = vpop.f32.mrf.mxu0
        %603 = vmatprep.mubr.f32.mxu0 0.0
        %604 = vmatmul.mubr.f32.gmra.mxu0 %v348
        %v605 = vpop.f32.mrf.mxu0
        %v606 = vadd.f32 %v407, %v605
        %v607 = vpop.f32.mrf.mxu0
        %608 = vmatprep.mubr.f32.mxu0 0.0
        %609 = vmatmul.mubr.f32.gmra.mxu0 %v349
        %v610 = vpop.f32.mrf.mxu0
        %v611 = vadd.f32 %v407, %v610
        %v612 = vpop.f32.mrf.mxu0
        %613 = vmatprep.mubr.f32.mxu0 0.0
        %614 = vmatmul.mubr.f32.gmra.mxu0 %v350
        %v615 = vpop.f32.mrf.mxu0
        %v616 = vadd.f32 %v407, %v615
        %v617 = vpop.f32.mrf.mxu0
        %618 = vmatprep.mubr.f32.mxu0 0.0
        %619 = vmatmul.mubr.f32.gmra.mxu0 %v351
        %v620 = vpop.f32.mrf.mxu0
        %v621 = vadd.f32 %v407, %v620
        %v622 = vpop.f32.mrf.mxu0
        %623 = vmatprep.mubr.f32.mxu0 0.0
        %624 = vmatmul.mubr.f32.gmra.mxu0 %v352
        %v625 = vpop.f32.mrf.mxu0
        %v626 = vadd.f32 %v407, %v625
        %v627 = vpop.f32.mrf.mxu0
        %628 = vmatprep.mubr.f32.mxu0 0.0
        %629 = vmatmul.mubr.f32.gmra.mxu0 %v353
        %v630 = vpop.f32.mrf.mxu0
        %v631 = vadd.f32 %v407, %v630
        %v632 = vpop.f32.mrf.mxu0
        %633 = vmatprep.mubr.f32.mxu0 0.0
        %634 = vmatmul.mubr.f32.gmra.mxu0 %v354
        %v635 = vpop.f32.mrf.mxu0
        %v636 = vadd.f32 %v407, %v635
        %v637 = vpop.f32.mrf.mxu0
        %638 = vmatprep.mubr.f32.mxu0 0.0
        %639 = vmatmul.mubr.f32.gmra.mxu0 %v355
        %v640 = vpop.f32.mrf.mxu0
        %v641 = vadd.f32 %v407, %v640
        %v642 = vpop.f32.mrf.mxu0
        %643 = vmatprep.mubr.f32.mxu0 0.0
        %644 = vmatmul.mubr.f32.gmra.mxu0 %v356
        %v645 = vpop.f32.mrf.mxu0
        %v646 = vadd.f32 %v407, %v645
        %v647 = vpop.f32.mrf.mxu0
        %648 = vmatprep.mubr.f32.mxu0 0.0
        %649 = vmatmul.mubr.f32.gmra.mxu0 %v357
        %v650 = vpop.f32.mrf.mxu0
        %v651 = vadd.f32 %v407, %v650
        %v652 = vpop.f32.mrf.mxu0
        %653 = vmatprep.mubr.f32.mxu0 0.0
        %654 = vmatmul.mubr.f32.gmra.mxu0 %v358
        %v655 = vpop.f32.mrf.mxu0
        %v656 = vadd.f32 %v407, %v655
        %v657 = vpop.f32.mrf.mxu0
        %658 = vmatprep.mubr.f32.mxu0 0.0
        %659 = vmatmul.mubr.f32.gmra.mxu0 %v359
        %v660 = vpop.f32.mrf.mxu0
        %v661 = vadd.f32 %v407, %v660
        %v662 = vpop.f32.mrf.mxu0
        %663 = vmatprep.mubr.f32.mxu0 0.0
        %664 = vmatmul.mubr.f32.gmra.mxu0 %v360
        %v665 = vpop.f32.mrf.mxu0
        %v666 = vadd.f32 %v407, %v665
        %v667 = vpop.f32.mrf.mxu0
        %668 = vmatprep.mubr.f32.mxu0 0.0
        %669 = vmatmul.mubr.f32.gmra.mxu0 %v361
        %v670 = vpop.f32.mrf.mxu0
        %v671 = vadd.f32 %v407, %v670
        %v672 = vpop.f32.mrf.mxu0
        %673 = vmatprep.mubr.f32.mxu0 0.0
        %674 = vmatmul.mubr.f32.gmra.mxu0 %v362
        %v675 = vpop.f32.mrf.mxu0
        %v676 = vadd.f32 %v407, %v675
        %v677 = vpop.f32.mrf.mxu0
        %678 = vmatprep.mubr.f32.mxu0 0.0
        %679 = vmatmul.mubr.f32.gmra.mxu0 %v363
        %v680 = vpop.f32.mrf.mxu0
        %v681 = vadd.f32 %v407, %v680
        %v682 = vpop.f32.mrf.mxu0
        %683 = vmatprep.mubr.f32.mxu0 0.0
        %684 = vmatmul.mubr.f32.gmra.mxu0 %v364
        %v685 = vpop.f32.mrf.mxu0
        %v686 = vadd.f32 %v407, %v685
        %v687 = vpop.f32.mrf.mxu0
        %688 = vmatprep.mubr.f32.mxu0 0.0
        %689 = vmatmul.mubr.f32.gmra.mxu0 %v365
        %v690 = vpop.f32.mrf.mxu0
        %v691 = vadd.f32 %v407, %v690
        %v692 = vpop.f32.mrf.mxu0
        %693 = vmatprep.mubr.f32.mxu0 0.0
        %694 = vmatmul.mubr.f32.gmra.mxu0 %v366
        %v695 = vpop.f32.mrf.mxu0
        %v696 = vadd.f32 %v407, %v695
        %v697 = vpop.f32.mrf.mxu0
        %698 = vmatprep.mubr.f32.mxu0 0.0
        %699 = vmatmul.mubr.f32.gmra.mxu0 %v367
        %v700 = vpop.f32.mrf.mxu0
        %v701 = vadd.f32 %v407, %v700
        %v702 = vpop.f32.mrf.mxu0
        %703 = vmatprep.mubr.f32.mxu0 0.0
        %704 = vmatmul.mubr.f32.gmra.mxu0 %v368
        %v705 = vpop.f32.mrf.mxu0
        %v706 = vadd.f32 %v407, %v705
        %v707 = vpop.f32.mrf.mxu0
        %708 = vmatprep.mubr.f32.mxu0 0.0
        %709 = vmatmul.mubr.f32.gmra.mxu0 %v369
        %v710 = vpop.f32.mrf.mxu0
        %v711 = vadd.f32 %v407, %v710
        %v712 = vpop.f32.mrf.mxu0
        %713 = vmatprep.mubr.f32.mxu0 0.0
        %714 = vmatmul.mubr.f32.gmra.mxu0 %v370
        %v715 = vpop.f32.mrf.mxu0
        %v716 = vadd.f32 %v407, %v715
        %v717 = vpop.f32.mrf.mxu0
        %718 = vmatprep.mubr.f32.mxu0 0.0
        %719 = vmatmul.mubr.f32.gmra.mxu0 %v371
        %v720 = vpop.f32.mrf.mxu0
        %v721 = vadd.f32 %v407, %v720
        %v722 = vpop.f32.mrf.mxu0
        %723 = vmatprep.mubr.f32.mxu0 0.0
        %724 = vmatmul.mubr.f32.gmra.mxu0 %v372
        %v725 = vpop.f32.mrf.mxu0
        %v726 = vadd.f32 %v407, %v725
        %v727 = vpop.f32.mrf.mxu0
        %728 = vmatprep.mubr.f32.mxu0 0.0
        %729 = vmatmul.mubr.f32.gmra.mxu0 %v373
        %v730 = vpop.f32.mrf.mxu0
        %v731 = vadd.f32 %v407, %v730
        %v732 = vpop.f32.mrf.mxu0
        %733 = vmatprep.mubr.f32.mxu0 0.0
        %734 = vmatmul.mubr.f32.gmra.mxu0 %v374
        %v735 = vpop.f32.mrf.mxu0
        %v736 = vadd.f32 %v407, %v735
        %v737 = vpop.f32.mrf.mxu0
        %738 = vmatprep.mubr.f32.mxu0 0.0
        %739 = vmatmul.mubr.f32.gmra.mxu0 %v375
        %v740 = vpop.f32.mrf.mxu0
        %v741 = vadd.f32 %v407, %v740
        %v742 = vpop.f32.mrf.mxu0
        %743 = vmatprep.mubr.f32.mxu0 0.0
        %744 = vmatmul.mubr.f32.gmra.mxu0 %v376
        %v745 = vpop.f32.mrf.mxu0
        %v746 = vadd.f32 %v407, %v745
        %v747 = vpop.f32.mrf.mxu0
        %748 = vmatprep.mubr.f32.mxu0 0.0
        %749 = vmatmul.mubr.f32.gmra.mxu0 %v377
        %v750 = vpop.f32.mrf.mxu0
        %v751 = vadd.f32 %v407, %v750
        %v752 = vpop.f32.mrf.mxu0
        %753 = vmatprep.mubr.f32.mxu0 0.0
        %754 = vmatmul.mubr.f32.gmra.mxu0 %v378
        %v755 = vpop.f32.mrf.mxu0
        %v756 = vadd.f32 %v407, %v755
        %v757 = vpop.f32.mrf.mxu0
        %758 = vmatprep.mubr.f32.mxu0 0.0
        %759 = vmatmul.mubr.f32.gmra.mxu0 %v379
        %v760 = vpop.f32.mrf.mxu0
        %v761 = vadd.f32 %v407, %v760
        %v762 = vpop.f32.mrf.mxu0
        %763 = vmatprep.mubr.f32.mxu0 0.0
        %764 = vmatmul.mubr.f32.gmra.mxu0 %v380
        %v765 = vpop.f32.mrf.mxu0
        %v766 = vadd.f32 %v407, %v765
        %v767 = vpop.f32.mrf.mxu0
        %768 = vmatprep.mubr.f32.mxu0 0.0
        %769 = vmatmul.mubr.f32.gmra.mxu0 %v381
        %v770 = vpop.f32.mrf.mxu0
        %v771 = vadd.f32 %v407, %v770
        %v772 = vpop.f32.mrf.mxu0
        %773 = vmatprep.mubr.f32.mxu0 0.0
        %774 = vmatmul.mubr.f32.gmra.mxu0 %v382
        %v775 = vpop.f32.mrf.mxu0
        %v776 = vadd.f32 %v407, %v775
        %v777 = vpop.f32.mrf.mxu0
        %778 = vmatprep.mubr.f32.mxu0 0.0
        %779 = vmatmul.mubr.f32.gmra.mxu0 %v383
        %v780 = vpop.f32.mrf.mxu0
        %v781 = vadd.f32 %v407, %v780
        %v782 = vpop.f32.mrf.mxu0
        %783 = vmatprep.mubr.f32.mxu0 0.0
        %784 = vmatmul.mubr.f32.gmra.mxu0 %v384
        %v785 = vpop.f32.mrf.mxu0
        %v786 = vadd.f32 %v407, %v785
        %v787 = vpop.f32.mrf.mxu0
        %788 = vmatprep.mubr.f32.mxu0 0.0
        %789 = vmatmul.mubr.f32.gmra.mxu0 %v385
        %v790 = vpop.f32.mrf.mxu0
        %v791 = vadd.f32 %v407, %v790
        %v792 = vpop.f32.mrf.mxu0
        %793 = vdwg.mxu0
        %v794 = vmul.f32 %v476, 0.5
        %v795 = vmul.f32 %v481, 0.5
        %v796 = vmul.f32 %v486, 0.5
        %v797 = vmul.f32 %v491, 0.5
        %v798 = vmul.f32 %v496, 0.5
        %v799 = vmul.f32 %v501, 0.5
        %v800 = vmul.f32 %v506, 0.5
        %v801 = vmul.f32 %v511, 0.5
        %v802 = vmul.f32 %v516, 0.5
        %v803 = vmul.f32 %v521, 0.5
        %v804 = vmul.f32 %v526, 0.5
        %v805 = vmul.f32 %v531, 0.5
        %v806 = vmul.f32 %v536, 0.5
        %v807 = vmul.f32 %v541, 0.5
        %v808 = vmul.f32 %v546, 0.5
        %v809 = vmul.f32 %v551, 0.5
        %v810 = vmul.f32 %v556, 0.5
        %v811 = vmul.f32 %v561, 0.5
        %v812 = vmul.f32 %v566, 0.5
        %v813 = vmul.f32 %v571, 0.5
        %v814 = vmul.f32 %v576, 0.5
        %v815 = vmul.f32 %v581, 0.5
        %v816 = vmul.f32 %v586, 0.5
        %v817 = vmul.f32 %v591, 0.5
        %v818 = vmul.f32 %v596, 0.5
        %v819 = vmul.f32 %v601, 0.5
        %v820 = vmul.f32 %v606, 0.5
        %v821 = vmul.f32 %v611, 0.5
        %v822 = vmul.f32 %v616, 0.5
        %v823 = vmul.f32 %v621, 0.5
        %v824 = vmul.f32 %v626, 0.5
        %v825 = vmul.f32 %v631, 0.5
        %v826 = vmul.f32 %v636, 0.5
        %v827 = vmul.f32 %v641, 0.5
        %v828 = vmul.f32 %v646, 0.5
        %v829 = vmul.f32 %v651, 0.5
        %v830 = vmul.f32 %v656, 0.5
        %v831 = vmul.f32 %v661, 0.5
        %v832 = vmul.f32 %v666, 0.5
        %v833 = vmul.f32 %v671, 0.5
        %v834 = vmul.f32 %v676, 0.5
        %v835 = vmul.f32 %v681, 0.5
        %v836 = vmul.f32 %v686, 0.5
        %v837 = vmul.f32 %v691, 0.5
        %v838 = vmul.f32 %v696, 0.5
        %v839 = vmul.f32 %v701, 0.5
        %v840 = vmul.f32 %v706, 0.5
        %v841 = vmul.f32 %v711, 0.5
        %v842 = vmul.f32 %v716, 0.5
        %v843 = vmul.f32 %v721, 0.5
        %v844 = vmul.f32 %v726, 0.5
        %v845 = vmul.f32 %v731, 0.5
        %v846 = vmul.f32 %v736, 0.5
        %v847 = vmul.f32 %v741, 0.5
        %v848 = vmul.f32 %v746, 0.5
        %v849 = vmul.f32 %v751, 0.5
        %v850 = vmul.f32 %v756, 0.5
        %v851 = vmul.f32 %v761, 0.5
        %v852 = vmul.f32 %v766, 0.5
        %v853 = vmul.f32 %v771, 0.5
        %v854 = vmul.f32 %v776, 0.5
        %v855 = vmul.f32 %v781, 0.5
        %v856 = vmul.f32 %v786, 0.5
        %v857 = vmul.f32 %v791, 0.5
        %v858 = vtanh.pop %v794
        %v859 = vtanh.pop %v795
        %v860 = vtanh.pop %v796
        %v861 = vtanh.pop %v797
        %v862 = vtanh.pop %v798
        %v863 = vtanh.pop %v799
        %v864 = vtanh.pop %v800
        %v865 = vtanh.pop %v801
        %v866 = vtanh.pop %v802
        %v867 = vtanh.pop %v803
        %v868 = vtanh.pop %v804
        %v869 = vtanh.pop %v805
        %v870 = vtanh.pop %v806
        %v871 = vtanh.pop %v807
        %v872 = vtanh.pop %v808
        %v873 = vtanh.pop %v809
        %v874 = vtanh.pop %v810
        %v875 = vtanh.pop %v811
        %v876 = vtanh.pop %v812
        %v877 = vtanh.pop %v813
        %v878 = vtanh.pop %v814
        %v879 = vtanh.pop %v815
        %v880 = vtanh.pop %v816
        %v881 = vtanh.pop %v817
        %v882 = vtanh.pop %v818
        %v883 = vtanh.pop %v819
        %v884 = vtanh.pop %v820
        %v885 = vtanh.pop %v821
        %v886 = vtanh.pop %v822
        %v887 = vtanh.pop %v823
        %v888 = vtanh.pop %v824
        %v889 = vtanh.pop %v825
        %v890 = vtanh.pop %v826
        %v891 = vtanh.pop %v827
        %v892 = vtanh.pop %v828
        %v893 = vtanh.pop %v829
        %v894 = vtanh.pop %v830
        %v895 = vtanh.pop %v831
        %v896 = vtanh.pop %v832
        %v897 = vtanh.pop %v833
        %v898 = vtanh.pop %v834
        %v899 = vtanh.pop %v835
        %v900 = vtanh.pop %v836
        %v901 = vtanh.pop %v837
        %v902 = vtanh.pop %v838
        %v903 = vtanh.pop %v839
        %v904 = vtanh.pop %v840
        %v905 = vtanh.pop %v841
        %v906 = vtanh.pop %v842
        %v907 = vtanh.pop %v843
        %v908 = vtanh.pop %v844
        %v909 = vtanh.pop %v845
        %v910 = vtanh.pop %v846
        %v911 = vtanh.pop %v847
        %v912 = vtanh.pop %v848
        %v913 = vtanh.pop %v849
        %v914 = vtanh.pop %v850
        %v915 = vtanh.pop %v851
        %v916 = vtanh.pop %v852
        %v917 = vtanh.pop %v853
        %v918 = vtanh.pop %v854
        %v919 = vtanh.pop %v855
        %v920 = vtanh.pop %v856
        %v921 = vtanh.pop %v857
        %v922 = vadd.f32 %v858, 1.0
        %v923 = vadd.f32 %v859, 1.0
        %v924 = vadd.f32 %v860, 1.0
        %v925 = vadd.f32 %v861, 1.0
        %v926 = vadd.f32 %v862, 1.0
        %v927 = vadd.f32 %v863, 1.0
        %v928 = vadd.f32 %v864, 1.0
        %v929 = vadd.f32 %v865, 1.0
        %v930 = vadd.f32 %v866, 1.0
        %v931 = vadd.f32 %v867, 1.0
        %v932 = vadd.f32 %v868, 1.0
        %v933 = vadd.f32 %v869, 1.0
        %v934 = vadd.f32 %v870, 1.0
        %v935 = vadd.f32 %v871, 1.0
        %v936 = vadd.f32 %v872, 1.0
        %v937 = vadd.f32 %v873, 1.0
        %v938 = vadd.f32 %v874, 1.0
        %v939 = vadd.f32 %v875, 1.0
        %v940 = vadd.f32 %v876, 1.0
        %v941 = vadd.f32 %v877, 1.0
        %v942 = vadd.f32 %v878, 1.0
        %v943 = vadd.f32 %v879, 1.0
        %v944 = vadd.f32 %v880, 1.0
        %v945 = vadd.f32 %v881, 1.0
        %v946 = vadd.f32 %v882, 1.0
        %v947 = vadd.f32 %v883, 1.0
        %v948 = vadd.f32 %v884, 1.0
        %v949 = vadd.f32 %v885, 1.0
        %v950 = vadd.f32 %v886, 1.0
        %v951 = vadd.f32 %v887, 1.0
        %v952 = vadd.f32 %v888, 1.0
        %v953 = vadd.f32 %v889, 1.0
        %v954 = vadd.f32 %v890, 1.0
        %v955 = vadd.f32 %v891, 1.0
        %v956 = vadd.f32 %v892, 1.0
        %v957 = vadd.f32 %v893, 1.0
        %v958 = vadd.f32 %v894, 1.0
        %v959 = vadd.f32 %v895, 1.0
        %v960 = vadd.f32 %v896, 1.0
        %v961 = vadd.f32 %v897, 1.0
        %v962 = vadd.f32 %v898, 1.0
        %v963 = vadd.f32 %v899, 1.0
        %v964 = vadd.f32 %v900, 1.0
        %v965 = vadd.f32 %v901, 1.0
        %v966 = vadd.f32 %v902, 1.0
        %v967 = vadd.f32 %v903, 1.0
        %v968 = vadd.f32 %v904, 1.0
        %v969 = vadd.f32 %v905, 1.0
        %v970 = vadd.f32 %v906, 1.0
        %v971 = vadd.f32 %v907, 1.0
        %v972 = vadd.f32 %v908, 1.0
        %v973 = vadd.f32 %v909, 1.0
        %v974 = vadd.f32 %v910, 1.0
        %v975 = vadd.f32 %v911, 1.0
        %v976 = vadd.f32 %v912, 1.0
        %v977 = vadd.f32 %v913, 1.0
        %v978 = vadd.f32 %v914, 1.0
        %v979 = vadd.f32 %v915, 1.0
        %v980 = vadd.f32 %v916, 1.0
        %v981 = vadd.f32 %v917, 1.0
        %v982 = vadd.f32 %v918, 1.0
        %v983 = vadd.f32 %v919, 1.0
        %v984 = vadd.f32 %v920, 1.0
        %v985 = vadd.f32 %v921, 1.0
        %v986 = vmul.f32 %v922, 0.5
        %v987 = vmul.f32 %v923, 0.5
        %v988 = vmul.f32 %v924, 0.5
        %v989 = vmul.f32 %v925, 0.5
        %v990 = vmul.f32 %v926, 0.5
        %v991 = vmul.f32 %v927, 0.5
        %v992 = vmul.f32 %v928, 0.5
        %v993 = vmul.f32 %v929, 0.5
        %v994 = vmul.f32 %v930, 0.5
        %v995 = vmul.f32 %v931, 0.5
        %v996 = vmul.f32 %v932, 0.5
        %v997 = vmul.f32 %v933, 0.5
        %v998 = vmul.f32 %v934, 0.5
        %v999 = vmul.f32 %v935, 0.5
        %v1000 = vmul.f32 %v936, 0.5
        %v1001 = vmul.f32 %v937, 0.5
        %v1002 = vmul.f32 %v938, 0.5
        %v1003 = vmul.f32 %v939, 0.5
        %v1004 = vmul.f32 %v940, 0.5
        %v1005 = vmul.f32 %v941, 0.5
        %v1006 = vmul.f32 %v942, 0.5
        %v1007 = vmul.f32 %v943, 0.5
        %v1008 = vmul.f32 %v944, 0.5
        %v1009 = vmul.f32 %v945, 0.5
        %v1010 = vmul.f32 %v946, 0.5
        %v1011 = vmul.f32 %v947, 0.5
        %v1012 = vmul.f32 %v948, 0.5
        %v1013 = vmul.f32 %v949, 0.5
        %v1014 = vmul.f32 %v950, 0.5
        %v1015 = vmul.f32 %v951, 0.5
        %v1016 = vmul.f32 %v952, 0.5
        %v1017 = vmul.f32 %v953, 0.5
        %v1018 = vmul.f32 %v954, 0.5
        %v1019 = vmul.f32 %v955, 0.5
        %v1020 = vmul.f32 %v956, 0.5
        %v1021 = vmul.f32 %v957, 0.5
        %v1022 = vmul.f32 %v958, 0.5
        %v1023 = vmul.f32 %v959, 0.5
        %v1024 = vmul.f32 %v960, 0.5
        %v1025 = vmul.f32 %v961, 0.5
        %v1026 = vmul.f32 %v962, 0.5
        %v1027 = vmul.f32 %v963, 0.5
        %v1028 = vmul.f32 %v964, 0.5
        %v1029 = vmul.f32 %v965, 0.5
        %v1030 = vmul.f32 %v966, 0.5
        %v1031 = vmul.f32 %v967, 0.5
        %v1032 = vmul.f32 %v968, 0.5
        %v1033 = vmul.f32 %v969, 0.5
        %v1034 = vmul.f32 %v970, 0.5
        %v1035 = vmul.f32 %v971, 0.5
        %v1036 = vmul.f32 %v972, 0.5
        %v1037 = vmul.f32 %v973, 0.5
        %v1038 = vmul.f32 %v974, 0.5
        %v1039 = vmul.f32 %v975, 0.5
        %v1040 = vmul.f32 %v976, 0.5
        %v1041 = vmul.f32 %v977, 0.5
        %v1042 = vmul.f32 %v978, 0.5
        %v1043 = vmul.f32 %v979, 0.5
        %v1044 = vmul.f32 %v980, 0.5
        %v1045 = vmul.f32 %v981, 0.5
        %v1046 = vmul.f32 %v982, 0.5
        %v1047 = vmul.f32 %v983, 0.5
        %v1048 = vmul.f32 %v984, 0.5
        %v1049 = vmul.f32 %v985, 0.5
        %vm1050 = vcmask 130048
        %1051 = vst.msk [vmem:[%s192] sm:$0xff] %vm1050, %v986
        %1052 = vst.msk [vmem:[%s192 + $0x8] sm:$0xff] %vm1050, %v987
        %1053 = vst.msk [vmem:[%s192 + $0x10] sm:$0xff] %vm1050, %v988
        %1054 = vst.msk [vmem:[%s192 + $0x18] sm:$0xff] %vm1050, %v989
        %1055 = vst.msk [vmem:[%s192 + $0x20] sm:$0xff] %vm1050, %v990
        %1056 = vst.msk [vmem:[%s192 + $0x28] sm:$0xff] %vm1050, %v991
        %1057 = vst.msk [vmem:[%s192 + $0x30] sm:$0xff] %vm1050, %v992
        %1058 = vst.msk [vmem:[%s192 + $0x38] sm:$0xff] %vm1050, %v993
        %1059 = vst.msk [vmem:[%s192 + $0x40] sm:$0xff] %vm1050, %v994
        %1060 = vst.msk [vmem:[%s192 + $0x48] sm:$0xff] %vm1050, %v995
        %1061 = vst.msk [vmem:[%s192 + $0x50] sm:$0xff] %vm1050, %v996
        %1062 = vst.msk [vmem:[%s192 + $0x58] sm:$0xff] %vm1050, %v997
        %1063 = vst.msk [vmem:[%s192 + $0x60] sm:$0xff] %vm1050, %v998
        %1064 = vst.msk [vmem:[%s192 + $0x68] sm:$0xff] %vm1050, %v999
        %1065 = vst.msk [vmem:[%s192 + $0x70] sm:$0xff] %vm1050, %v1000
        %1066 = vst.msk [vmem:[%s192 + $0x78] sm:$0xff] %vm1050, %v1001
        %1067 = vst.msk [vmem:[%s192 + $0x80] sm:$0xff] %vm1050, %v1002
        %1068 = vst.msk [vmem:[%s192 + $0x88] sm:$0xff] %vm1050, %v1003
        %1069 = vst.msk [vmem:[%s192 + $0x90] sm:$0xff] %vm1050, %v1004
        %1070 = vst.msk [vmem:[%s192 + $0x98] sm:$0xff] %vm1050, %v1005
        %1071 = vst.msk [vmem:[%s192 + $0xa0] sm:$0xff] %vm1050, %v1006
        %1072 = vst.msk [vmem:[%s192 + $0xa8] sm:$0xff] %vm1050, %v1007
        %1073 = vst.msk [vmem:[%s192 + $0xb0] sm:$0xff] %vm1050, %v1008
        %1074 = vst.msk [vmem:[%s192 + $0xb8] sm:$0xff] %vm1050, %v1009
        %1075 = vst.msk [vmem:[%s192 + $0xc0] sm:$0xff] %vm1050, %v1010
        %1076 = vst.msk [vmem:[%s192 + $0xc8] sm:$0xff] %vm1050, %v1011
        %1077 = vst.msk [vmem:[%s192 + $0xd0] sm:$0xff] %vm1050, %v1012
        %1078 = vst.msk [vmem:[%s192 + $0xd8] sm:$0xff] %vm1050, %v1013
        %1079 = vst.msk [vmem:[%s192 + $0xe0] sm:$0xff] %vm1050, %v1014
        %1080 = vst.msk [vmem:[%s192 + $0xe8] sm:$0xff] %vm1050, %v1015
        %1081 = vst.msk [vmem:[%s192 + $0xf0] sm:$0xff] %vm1050, %v1016
        %1082 = vst.msk [vmem:[%s192 + $0xf8] sm:$0xff] %vm1050, %v1017
        %1083 = vst.msk [vmem:[%s192 + $0x100] sm:$0xff] %vm1050, %v1018
        %1084 = vst.msk [vmem:[%s192 + $0x108] sm:$0xff] %vm1050, %v1019
        %1085 = vst.msk [vmem:[%s192 + $0x110] sm:$0xff] %vm1050, %v1020
        %1086 = vst.msk [vmem:[%s192 + $0x118] sm:$0xff] %vm1050, %v1021
        %1087 = vst.msk [vmem:[%s192 + $0x120] sm:$0xff] %vm1050, %v1022
        %1088 = vst.msk [vmem:[%s192 + $0x128] sm:$0xff] %vm1050, %v1023
        %1089 = vst.msk [vmem:[%s192 + $0x130] sm:$0xff] %vm1050, %v1024
        %1090 = vst.msk [vmem:[%s192 + $0x138] sm:$0xff] %vm1050, %v1025
        %1091 = vst.msk [vmem:[%s192 + $0x140] sm:$0xff] %vm1050, %v1026
        %1092 = vst.msk [vmem:[%s192 + $0x148] sm:$0xff] %vm1050, %v1027
        %1093 = vst.msk [vmem:[%s192 + $0x150] sm:$0xff] %vm1050, %v1028
        %1094 = vst.msk [vmem:[%s192 + $0x158] sm:$0xff] %vm1050, %v1029
        %1095 = vst.msk [vmem:[%s192 + $0x160] sm:$0xff] %vm1050, %v1030
        %1096 = vst.msk [vmem:[%s192 + $0x168] sm:$0xff] %vm1050, %v1031
        %1097 = vst.msk [vmem:[%s192 + $0x170] sm:$0xff] %vm1050, %v1032
        %1098 = vst.msk [vmem:[%s192 + $0x178] sm:$0xff] %vm1050, %v1033
        %1099 = vst.msk [vmem:[%s192 + $0x180] sm:$0xff] %vm1050, %v1034
        %1100 = vst.msk [vmem:[%s192 + $0x188] sm:$0xff] %vm1050, %v1035
        %1101 = vst.msk [vmem:[%s192 + $0x190] sm:$0xff] %vm1050, %v1036
        %1102 = vst.msk [vmem:[%s192 + $0x198] sm:$0xff] %vm1050, %v1037
        %1103 = vst.msk [vmem:[%s192 + $0x1a0] sm:$0xff] %vm1050, %v1038
        %1104 = vst.msk [vmem:[%s192 + $0x1a8] sm:$0xff] %vm1050, %v1039
        %1105 = vst.msk [vmem:[%s192 + $0x1b0] sm:$0xff] %vm1050, %v1040
        %1106 = vst.msk [vmem:[%s192 + $0x1b8] sm:$0xff] %vm1050, %v1041
        %1107 = vst.msk [vmem:[%s192 + $0x1c0] sm:$0xff] %vm1050, %v1042
        %1108 = vst.msk [vmem:[%s192 + $0x1c8] sm:$0xff] %vm1050, %v1043
        %1109 = vst.msk [vmem:[%s192 + $0x1d0] sm:$0xff] %vm1050, %v1044
        %1110 = vst.msk [vmem:[%s192 + $0x1d8] sm:$0xff] %vm1050, %v1045
        %1111 = vst.msk [vmem:[%s192 + $0x1e0] sm:$0xff] %vm1050, %v1046
        %1112 = vst.msk [vmem:[%s192 + $0x1e8] sm:$0xff] %vm1050, %v1047
        %1113 = vst.msk [vmem:[%s192 + $0x1f0] sm:$0xff] %vm1050, %v1048
        %1114 = vst.msk [vmem:[%s192 + $0x1f8] sm:$0xff] %vm1050, %v1049
        %s1115 = smul.u32 64, %s17
        %p1116 = scmp.lt.s32.totalorder %s1115, 127
        %s1117 = scalar_select %p1116, %s1115, 127
        %s1118 = smul.addr %s1117, 8
        %s1119 = scalar_lea.vmem %s3, %s1118
        // Predicated region
        $region37: #{tpu_custom_call.1} parent=31 // pred_check
          %p1120 = pneg %p103
        $region38: #{tpu_custom_call.1} parent=31 // pred_check_branch
          %1122 = sbr.rel (%p1120) target = $region40
        $region39: #{tpu_custom_call.1} parent=31 // pred_region
          %s1123 = smul.u32 64, %s17
        $region40: #{tpu_custom_call.1} parent=31 // pred_fallthru
          _
      $region32: #{tpu_custom_call.1} parent=5 // pred_fallthru
        _
      %p1124 = scmp.le.s32.totalorder 2, %s12
      // Predicated region
      $region41: #{tpu_custom_call.1} parent=5 // pred_check
        %p1125 = pneg %p1124
      $region42: #{tpu_custom_call.1} parent=5 // pred_check_branch
        %1127 = sbr.rel (%p1125) target = $region44
      $region43: #{tpu_custom_call.1} parent=5 // pred_region
        %s1128 = ssub.s32 %s12, 2
        // Predicated region
        $region45: #{tpu_custom_call.1} parent=43 // pred_check
          %p1129 = pneg %p109
        $region46: #{tpu_custom_call.1} parent=43 // pred_check_branch
          %1131 = sbr.rel (%p1129) target = $region48
        $region47: #{tpu_custom_call.1} parent=43 // pred_region
          %s1132 = smul.u32 64, %s18
          %p1133 = scmp.lt.s32.totalorder %s1132, 127
          %s1134 = scalar_select %p1133, %s1132, 127
          %s1135 = smul.addr %s1134, 8
          %s1136 = scalar_lea.vmem %s3, %s1135
        $region48: #{tpu_custom_call.1} parent=43 // pred_fallthru
          _
      $region44: #{tpu_custom_call.1} parent=5 // pred_fallthru
        _
    $region6: #{tpu_custom_call.1} parent=1 // loop_footer
      %s16 = sadd.s32 1, %s12
    $region7: #{tpu_custom_call.1} parent=1 // loop_footer_branch
      %11 = sbr.rel target = $region3
    $region8: #{tpu_custom_call.1} parent=1 // loop_exit
      _
    %1137 = vsyncpa [#allocation3], 1
    %s1138 = scalar_lea.sflag [#allocation3], 1
    %1139 = vsyncpa %s1138, 1

</llo_original>
